<compile_context>
chip_gen: v7x
topology: tpu7x:2x2x1
jax: 0.10.0
libtpu: 0.0.40
codegen_flags: <defaults>
</compile_context>

<pallas_src>
import functools

import jax
import jax.numpy as jnp
from jax.experimental import pallas as pl
from jax.experimental.pallas import tpu as pltpu


def _round_up(x, m):
    return (x + m - 1) // m * m


def _vmem_capacity_bytes(default=64 * 1024 * 1024):
    """Per-core VMEM capacity; conservative (v7x) default if the query fails."""
    try:
        info = pltpu.get_tpu_info()
        cap = getattr(info, "vmem_capacity_bytes", None)
        if cap:
            return int(cap)
    except Exception:
        pass
    return default


def _choose_tiles(B, S, H, Cp, h_itemsize, w_itemsize, vmem_limit):
    """Pick (TB, TS) so the double-buffered hidden tile fits the VMEM budget."""
    # Batch tile: multiple of 8 (sublane-dense output rows).  Keep >= 2 batch
    # tiles when the batch is large enough so "parallel" can shard across
    # v7x's two TensorCores; cap at 128 (fills MXU rows in the epilogue).
    if B <= 8:
        TB = B                       # block dim == full array dim: always legal
    elif B <= 16:
        TB = 8
    else:
        TB = min(128, _round_up((B + 1) // 2, 8))

    Hl = _round_up(H, 128)           # lane-padded width as laid out in VMEM
    resident = (2 * H * Cp * w_itemsize      # weight (double-buffered by default)
                + 2 * Cp * 4                 # bias
                + 2 * TB * Cp * 4            # output blocks
                + TB * Hl * 4)               # f32 accumulator scratch
    headroom = 4 * 1024 * 1024
    min_budget = 2 * TB * 8 * Hl * h_itemsize
    hidden_budget = max(vmem_limit - resident - headroom, min_budget)
    ts_max = hidden_budget // (2 * TB * Hl * h_itemsize)   # 2x: double-buffered
    ts_max = max(8, min(int(ts_max), 512))

    if S <= ts_max:
        return TB, S                 # whole sequence in one tile; seq grid = 1

    # Prefer the largest multiple-of-8 tile <= ts_max that divides S so the
    # big hidden tensor never needs a wrapper-side pad copy.
    ts = (ts_max // 8) * 8
    cand = ts
    while cand >= 8:
        if S % cand == 0:
            return TB, cand
        cand -= 8
    return TB, ts                    # no divisor found: fall back to seq padding


def _head_kernel(h_ref, w_ref, b_ref, o_ref, acc_ref, *, inv_seq_len):
    """Mean-pool over seq (reduction over grid axis 1) + dense projection.

    h_ref  : [TB, TS, H]   hidden-state tile (bf16 or f32)
    w_ref  : [H,  Cp]      linear weight (in, out), resident across the grid
    b_ref  : [1,  Cp]      linear bias (f32), resident across the grid
    o_ref  : [TB, Cp]      logits tile (f32); written on the last seq step
    acc_ref: [TB, H]       f32 pooled-sum accumulator (VMEM scratch)
    """
    j = pl.program_id(1)

    @pl.when(j == 0)
    def _():
        acc_ref[...] = jnp.zeros_like(acc_ref)

    # Widening sum over the seq tile straight into f32: no explicit f32 copy
    # of the bf16 tile is materialized (saves vregs/VMEM and VALU work).
    acc_ref[...] += jnp.sum(h_ref[...], axis=1, dtype=jnp.float32)

    @pl.when(j == pl.num_programs(1) - 1)
    def _():
        # Fold the 1/S mean scale in once, on the small [TB, H] tile.
        # Dropout: eval-mode nn.Dropout is identity, nothing to do.
        # TODO(synk): training-mode dropout (pltpu.prng_random_bits) not implemented.
        pooled = (acc_ref[...] * inv_seq_len).astype(w_ref.dtype)  # bf16 MXU path
        logits = jnp.dot(pooled, w_ref[...], preferred_element_type=jnp.float32)
        o_ref[...] = logits + b_ref[...]                           # bias broadcast


@functools.partial(jax.jit, static_argnames=("num_classes",))
def classifier_head(hidden_states, weight, bias, *, num_classes):
    """hidden_states: [B, S, H]; weight: [H, C] (in, out); bias: [C] -> logits [B, C]."""
    B, S, H = hidden_states.shape
    C = num_classes
    Cp = _round_up(C, 128)           # lane-dense class dim (tiny pad, cheap)

    # Generation-aware VMEM budget: ~48 MiB on v7x (64 MiB/TC), ~96 MiB on v5e/v6e.
    vmem_limit = min((_vmem_capacity_bytes() * 3) // 4, 96 * 1024 * 1024)

    # Weight stays in the activation dtype (bf16 fast MXU path); bias in f32.
    # Padded class columns are zero, sliced off below.
    w = jnp.pad(weight, ((0, 0), (0, Cp - C))).astype(hidden_states.dtype)
    b = jnp.pad(bias.astype(jnp.float32), ((0, Cp - C),)).reshape(1, Cp)

    TB, TS = _choose_tiles(B, S, H, Cp, hidden_states.dtype.itemsize,
                           w.dtype.itemsize, vmem_limit)

    # No pad of the big hidden tensor in the common case: H block == full H,
    # batch remainder handled by a cdiv grid (garbage rows never read back),
    # and TS divides S (or TS == S).  Pad seq only as a rare fallback; zero
    # padding is exact since we divide by the true S.
    h = hidden_states
    Sp = S
    if S % TS:
        Sp = _round_up(S, TS)
        h = jnp.pad(h, ((0, 0), (0, Sp - S), (0, 0)))

    kernel = functools.partial(_head_kernel, inv_seq_len=1.0 / S)

    out = pl.pallas_call(
        kernel,
        out_shape=jax.ShapeDtypeStruct((B, Cp), jnp.float32),
        grid_spec=pltpu.PrefetchScalarGridSpec(
            num_scalar_prefetch=0,
            grid=(pl.cdiv(B, TB), Sp // TS),            # (batch tiles, seq tiles)
            in_specs=[
                pl.BlockSpec((TB, TS, H), lambda i, j: (i, j, 0)),
                pl.BlockSpec((H, Cp), lambda i, j: (0, 0)),   # resident weight
                pl.BlockSpec((1, Cp), lambda i, j: (0, 0)),   # resident bias
            ],
            out_specs=pl.BlockSpec((TB, Cp), lambda i, j: (i, 0)),
            scratch_shapes=[pltpu.VMEM((TB, H), jnp.float32)],
        ),
        compiler_params=pltpu.CompilerParams(
            # batch tiles shard across TCs (v7x); seq axis is the reduction.
            dimension_semantics=("parallel", "arbitrary"),
            vmem_limit_bytes=vmem_limit,
        ),
    )(h, w, b)

    return out[:, :C]


def encoder_stub(input_ids, attention_mask, token_type_ids, emb_table):
    """Deterministic stand-in for the HF encoder's last_hidden_state.

    # TODO(synk): the full transformer encoder (BERT) is an external module and
    # is not translated; this stub returns deterministic [B, S, H] hidden states.
    """
    del attention_mask, token_type_ids
    return jnp.take(emb_table, input_ids, axis=0)  # [B, S, H]


if __name__ == "__main__":
    # Small, deterministic configuration.
    B, S, H = 2, 8, 32          # batch, seq_len, hidden_size
    NUM_CLASSES = 2             # binary classifier
    VOCAB = 100

    key = jax.random.PRNGKey(0)
    k_emb, k_w, k_b, k_ids = jax.random.split(key, 4)

    # Deterministic "encoder" parameters (embedding-lookup stub).
    emb_table = jax.random.normal(k_emb, (VOCAB, H), dtype=jnp.float32) * 0.02

    # Linear layer (nn.Linear(hidden_size, num_classes, bias=True)) parameters,
    # stored transposed as [H, C]; the wrapper handles all padding.
    w = jax.random.normal(k_w, (H, NUM_CLASSES), dtype=jnp.float32) * 0.02
    b = jax.random.normal(k_b, (NUM_CLASSES,), dtype=jnp.float32) * 0.02

    # Inputs matching the module's forward signature.
    input_ids = jax.random.randint(k_ids, (B, S), 0, VOCAB, dtype=jnp.int32)
    attention_mask = jnp.ones((B, S), dtype=jnp.int32)
    token_type_ids = jnp.zeros((B, S), dtype=jnp.int32)

    # Forward pass.  NOTE: attention_mask is ignored in pooling, matching the
    # reference module's plain .mean(dim=1).
    hidden_states = encoder_stub(input_ids, attention_mask, token_type_ids, emb_table)
    # Keep activations bf16 end-to-end: halves HBM traffic of the mem-bound head.
    hidden_bf16 = hidden_states.astype(jnp.bfloat16)

    logits = classifier_head(hidden_bf16, w, b, num_classes=NUM_CLASSES)
    logits = jax.block_until_ready(logits)

    # Cross-check against a plain-JAX reference of the head on the same inputs
    # (kernel uses bf16 weight / bf16 pooled with f32 accumulation).
    ref = jnp.mean(hidden_bf16.astype(jnp.float32), axis=1) @ w + b
    assert logits.shape == (B, NUM_CLASSES)
    assert jnp.allclose(logits, ref, atol=1e-3, rtol=1e-3), (logits, ref)

    print("KERNEL_OK")
</pallas_src>

<mosaic_0001>
module attributes {stable_mosaic.version = 11 : i64} {
  func.func @_head_kernel(%arg0: i32, %arg1: i32, %arg2: memref<2x8x32xbf16, #tpu.memory_space<vmem>>, %arg3: memref<32x128xbf16, #tpu.memory_space<vmem>>, %arg4: memref<1x128xf32, #tpu.memory_space<vmem>>, %arg5: memref<2x128xf32, #tpu.memory_space<vmem>>, %arg6: memref<2x32xf32, #tpu.memory_space<vmem>>) attributes {dimension_semantics = [#tpu.dimension_semantics<parallel>, #tpu.dimension_semantics<arbitrary>], iteration_bounds = array<i64: 1, 1>, scalar_prefetch = 0 : i64, scratch_operands = 1 : i64, tpu.core_type = #tpu.core_type<tc>, window_params = [{transform_indices = @transform_0, window_bounds = array<i64: 2, 8, 32>}, {pipeline_mode = #tpu.pipeline_mode<synchronous>, transform_indices = @transform_1, window_bounds = array<i64: 32, 128>}, {pipeline_mode = #tpu.pipeline_mode<synchronous>, transform_indices = @transform_2, window_bounds = array<i64: 1, 128>}, {transform_indices = @transform_3, window_bounds = array<i64: 2, 128>}]} {
    %c0_i32 = arith.constant 0 : i32
    %0 = arith.cmpi eq, %arg1, %c0_i32 : i32
    %1 = arith.extui %0 : i1 to i32
    %c0_i32_0 = arith.constant 0 : i32
    %2 = arith.cmpi ne, %1, %c0_i32_0 : i32
    scf.if %2 {
      %cst_9 = arith.constant 0.000000e+00 : f32
      %12 = vector.broadcast %cst_9 : f32 to vector<2x32xf32>
      %c0_10 = arith.constant 0 : index
      %c0_11 = arith.constant 0 : index
      %13 = vector.load %arg6[%c0_10, %c0_11] : memref<2x32xf32, #tpu.memory_space<vmem>>, vector<2x32xf32>
      tpu.vector_store %arg6[%c0_10, %c0_11], %12 {strides = array<i32>} : memref<2x32xf32, #tpu.memory_space<vmem>>, vector<2x32xf32>,
    } else {
    }
    %c0 = arith.constant 0 : index
    %c0_1 = arith.constant 0 : index
    %3 = vector.load %arg6[%c0, %c0_1] : memref<2x32xf32, #tpu.memory_space<vmem>>, vector<2x32xf32>
    %c0_2 = arith.constant 0 : index
    %c0_3 = arith.constant 0 : index
    %c0_4 = arith.constant 0 : index
    %4 = vector.load %arg2[%c0_2, %c0_3, %c0_4] : memref<2x8x32xbf16, #tpu.memory_space<vmem>>, vector<2x8x32xbf16>
    %5 = arith.extf %4 : vector<2x8x32xbf16> to vector<2x8x32xf32>
    %cst = arith.constant dense<0.000000e+00> : vector<2x32xf32>
    %6 = vector.multi_reduction <add>, %5, %cst [1] : vector<2x8x32xf32> to vector<2x32xf32>
    %7 = arith.addf %3, %6 : vector<2x32xf32>
    %c0_5 = arith.constant 0 : index
    %c0_6 = arith.constant 0 : index
    %8 = vector.load %arg6[%c0_5, %c0_6] : memref<2x32xf32, #tpu.memory_space<vmem>>, vector<2x32xf32>
    tpu.vector_store %arg6[%c0_5, %c0_6], %7 {strides = array<i32>} : memref<2x32xf32, #tpu.memory_space<vmem>>, vector<2x32xf32>,
    %c0_i32_7 = arith.constant 0 : i32
    %9 = arith.cmpi eq, %arg1, %c0_i32_7 : i32
    %10 = arith.extui %9 : i1 to i32
    %c0_i32_8 = arith.constant 0 : i32
    %11 = arith.cmpi ne, %10, %c0_i32_8 : i32
    scf.if %11 {
      %c0_9 = arith.constant 0 : index
      %c0_10 = arith.constant 0 : index
      %12 = vector.load %arg6[%c0_9, %c0_10] : memref<2x32xf32, #tpu.memory_space<vmem>>, vector<2x32xf32>
      %cst_11 = arith.constant 1.250000e-01 : f32
      %13 = vector.broadcast %cst_11 : f32 to vector<2x32xf32>
      %14 = arith.mulf %12, %13 : vector<2x32xf32>
      %15 = arith.truncf %14 : vector<2x32xf32> to vector<2x32xbf16>
      %c0_12 = arith.constant 0 : index
      %c0_13 = arith.constant 0 : index
      %16 = vector.load %arg3[%c0_12, %c0_13] : memref<32x128xbf16, #tpu.memory_space<vmem>>, vector<32x128xbf16>
      %cst_14 = arith.constant dense<0.000000e+00> : vector<2x128xf32>
      %17 = tpu.matmul %15, %16, %cst_14 {dimension_numbers = #tpu.dot_dimension_numbers<[1], [0], [0], [1], [0, 0, 1, 1], [], []>} : vector<2x32xbf16>, vector<32x128xbf16>, vector<2x128xf32> -> vector<2x128xf32>
      %c0_15 = arith.constant 0 : index
      %c0_16 = arith.constant 0 : index
      %18 = vector.load %arg4[%c0_15, %c0_16] : memref<1x128xf32, #tpu.memory_space<vmem>>, vector<1x128xf32>
      %19 = vector.broadcast %18 : vector<1x128xf32> to vector<2x128xf32>
      %20 = arith.addf %17, %19 : vector<2x128xf32>
      %c0_17 = arith.constant 0 : index
      %c0_18 = arith.constant 0 : index
      %21 = vector.load %arg5[%c0_17, %c0_18] : memref<2x128xf32, #tpu.memory_space<vmem>>, vector<2x128xf32>
      tpu.vector_store %arg5[%c0_17, %c0_18], %20 {strides = array<i32>} : memref<2x128xf32, #tpu.memory_space<vmem>>, vector<2x128xf32>,
    } else {
    }
    return
  }
  func.func @transform_0(%arg0: i32, %arg1: i32) -> (i32, i32, i32) {
    %c0_i32 = arith.constant 0 : i32
    %c0_i32_0 = arith.constant 0 : i32
    return %arg0, %arg1, %c0_i32 : i32, i32, i32
  }
  func.func @transform_1(%arg0: i32, %arg1: i32) -> (i32, i32) {
    %c0_i32 = arith.constant 0 : i32
    %c0_i32_0 = arith.constant 0 : i32
    %c0_i32_1 = arith.constant 0 : i32
    return %c0_i32, %c0_i32_0 : i32, i32
  }
  func.func @transform_2(%arg0: i32, %arg1: i32) -> (i32, i32) {
    %c0_i32 = arith.constant 0 : i32
    %c0_i32_0 = arith.constant 0 : i32
    %c0_i32_1 = arith.constant 0 : i32
    return %c0_i32, %c0_i32_0 : i32, i32
  }
  func.func @transform_3(%arg0: i32, %arg1: i32) -> (i32, i32) {
    %c0_i32 = arith.constant 0 : i32
    %c0_i32_0 = arith.constant 0 : i32
    return %arg0, %c0_i32 : i32, i32
  }
}

</mosaic_0001>

<llo_original>
// kernel: classifier_head.1
$region0: #{classifier_head.1}
  #allocation0 [shape = 'u32[]', space=smem, size = 0x4, offset = 0x4, fixed_abs, tag = 'smem constant byte address 0x4 - core index']
  #allocation1 [shape = 'u32[144,128]{1,0:T(1,128)}', space=vmem, size = 0x12000, scoped, tag = 'internal scratch']
  #allocation2 [shape = 'f32[2,32]{1,0:T(2,128)}', space=vmem, size = 0x400, scoped, tag = 'scratch operand']
  %s0 = inlined_call_operand.vmem [shape: bf16[2,8,32], index: 0, kind: input, shape index: {}]
  %s1 = inlined_call_operand.vmem [shape: bf16[32,128], index: 1, kind: input, shape index: {}]
  %s2 = inlined_call_operand.vmem [shape: f32[1,128], index: 2, kind: input, shape index: {}]
  %s3 = inlined_call_operand.hbm [shape: f32[2,128], index: 3, kind: output, shape index: {}]
  %s4 = sld [smem:[#allocation0]]
  $region30: #{classifier_head.1} parent=0
    _
  %s6 = ssub.s32 1, %s4
  %s7 = scalar_select 0, %s6, %s4
  $region1: #{classifier_head.1} parent=0
    #allocation3 [shape = 'u8[1024]{0}', space=vmem, size = 0x400, scoped, tag = 'output window, operand 0, single buffered']
    #allocation4 [shape = 's32[1]{0}', space=sflag, size = 0x4, scoped, tag = 'scoped memory for classifier_head.1']
    %8 = vsyncpa [#allocation4], 0
    // Predicated region
    $region2: #{classifier_head.1} parent=1 // pred_check
      _
    $region3: #{classifier_head.1} parent=1 // pred_check_branch
      %10 = sbr.rel (0) target = $region5
    $region4: #{classifier_head.1} parent=1 // pred_region
      _
    $region5: #{classifier_head.1} parent=1 // pred_fallthru
      _
    // Predicated region
    $region6: #{classifier_head.1} parent=1 // pred_check
      _
    $region7: #{classifier_head.1} parent=1 // pred_check_branch
      %12 = sbr.rel (0) target = $region9
    $region8: #{classifier_head.1} parent=1 // pred_region
      _
    $region9: #{classifier_head.1} parent=1 // pred_fallthru
      _
    // Predicated region
    $region10: #{classifier_head.1} parent=1 // pred_check
      _
    $region11: #{classifier_head.1} parent=1 // pred_check_branch
      %14 = sbr.rel (0) target = $region13
    $region12: #{classifier_head.1} parent=1 // pred_region
      _
    $region13: #{classifier_head.1} parent=1 // pred_fallthru
      _
    %p16 = scmp.eq.s32.totalorder 0, 0
    // Predicated region
    $region14: #{classifier_head.1} parent=1 // pred_check
      %p17 = pneg %p16
    $region15: #{classifier_head.1} parent=1 // pred_check_branch
      %19 = sbr.rel (%p17) target = $region17
    $region16: #{classifier_head.1} parent=1 // pred_region
      %vm20 = vcmask 254976
      %21 = vst.msk [vmem:[#allocation2] sm:$0x3] %vm20, 0.0
    $region17: #{classifier_head.1} parent=1 // pred_fallthru
      _
    %v22 = vld [vmem:[#allocation2] sm:$0x3]
    %v23 = vld [vmem:[%s0] sm:$0xf]
    %v24 = vld [vmem:[%s0 + $0x4] sm:$0xf]
    %v25 = vunpack.c.l.bf16 %v23
    %v26 = vunpack.c.l.bf16 %v24
    %vm27 = vcmask 261120
    %v28 = vsel %vm27, %v25, 0.0
    %v29 = vrot.slane %v28, 4
    %v30 = vadd.f32 %v28, %v29
    %v31 = vrot.slane %v30, 2
    %v32 = vadd.f32 %v30, %v31
    %v33 = vrot.slane %v32, 1
    %v34 = vadd.f32 %v32, %v33
    %v35 = vsel %vm27, %v26, 0.0
    %v36 = vrot.slane %v35, 4
    %v37 = vadd.f32 %v35, %v36
    %v38 = vrot.slane %v37, 2
    %v39 = vadd.f32 %v37, %v38
    %v40 = vrot.slane %v39, 1
    %v41 = vadd.f32 %v39, %v40
    %vm44 = vcmask 1041409
    %v45 = vsel %vm44, %v41, %v34
    %v47 = vadd.f32 %v22, %v45
    %vm48 = vcmask 254976
    %49 = vst.msk [vmem:[#allocation2] sm:$0x3] %vm48, %v47
    // Predicated region
    $region18: #{classifier_head.1} parent=1 // pred_check
      %p50 = pneg %p16
    $region19: #{classifier_head.1} parent=1 // pred_check_branch
      %52 = sbr.rel (%p50) target = $region21
    $region20: #{classifier_head.1} parent=1 // pred_region
      %v53 = vld [vmem:[#allocation2] sm:$0x3]
      %v54 = vmul.f32 %v53, 0.125
      %v55 = vpack.c.bf16 %v54, %v54
      %v56 = vld [vmem:[%s1] sm:$0xf]
      %v57 = vld [vmem:[%s1 + $0x4] sm:$0xf]
      %v58 = vld [vmem:[%s1 + $0x8] sm:$0xf]
      %v59 = vld [vmem:[%s1 + $0xc] sm:$0xf]
      %v60 = vld [vmem:[%s2] sm:$0x1]
      %v62 = vlaneseq
      %v63 = vshrl.u32 %v62, 7
      %v64 = vsub.s32 0, %v63
      %v65 = vrot.slane %v60, %v64
      %v71 = vunpack.c.l.b16 %v56
      %v72 = vunpack.c.l.b16 %v57
      %v73 = vunpack.c.l.b16 %v58
      %v74 = vunpack.c.l.b16 %v59
      %v75 = vpack.c.b16 %v72, %v71
      %v76 = vpack.c.b16 %v74, %v73
      %v80 = vsel %vm27, %v55, 0
      %82 = vmatprep.subr.bf16.mxu0 0
      %83 = vmatpush1.bf16.msra.mxu0 %v75
      %84 = vmatprep.subr.bf16.mxu0 0
      %85 = vmatpush1.bf16.msra.mxu0 %v76
      %86 = vmatprep.subr.bf16.mxu0 0
      %87 = vmatpush1.bf16.msra.mxu0 0
      %88 = vmatprep.subr.bf16.mxu0 0
      %89 = vmatpush1.bf16.msra.mxu0 0
      %90 = vmatprep.subr.bf16.mxu0 0
      %91 = vmatpush1.bf16.msra.mxu0 0
      %92 = vmatprep.subr.bf16.mxu0 0
      %93 = vmatpush1.bf16.msra.mxu0 0
      %94 = vmatprep.subr.bf16.mxu0 0
      %95 = vmatpush1.bf16.msra.mxu0 0
      %96 = vmatprep.subr.bf16.mxu0 0
      %97 = vmatpush1.bf16.msra.mxu0 0
      %98 = vmatprep.subr.bf16.mxu0 0
      %99 = vmatpush1.bf16.msra.mxu0 0
      %100 = vmatprep.subr.bf16.mxu0 0
      %101 = vmatpush1.bf16.msra.mxu0 0
      %102 = vmatprep.subr.bf16.mxu0 0
      %103 = vmatpush1.bf16.msra.mxu0 0
      %104 = vmatprep.subr.bf16.mxu0 0
      %105 = vmatpush1.bf16.msra.mxu0 0
      %106 = vmatprep.subr.bf16.mxu0 0
      %107 = vmatpush1.bf16.msra.mxu0 0
      %108 = vmatprep.subr.bf16.mxu0 0
      %109 = vmatpush1.bf16.msra.mxu0 0
      %110 = vmatprep.subr.bf16.mxu0 0
      %111 = vmatpush1.bf16.msra.mxu0 0
      %112 = vmatprep.subr.bf16.mxu0 0
      %113 = vmatpush1.bf16.msra.mxu0 0
      %114 = vmatprep.mubr.bf16.mxu0 0
      %115 = vmatmul.mubr.bf16.gmra.mrb[0].mxu0 %v80
      %v116 = vpop.f32.mrb[0].mxu0
      %v117 = vadd.f32 %v65, %v116
      %v118 = vpop.f32.mrb[0].mxu0
      %v119 = vpop.f32.mrb[0].mxu0
      %v120 = vpop.f32.mrb[0].mxu0
      %121 = vdwg.mxu0
      %122 = vst [vmem:[#allocation3] sm:$0x3] %v117
    $region21: #{classifier_head.1} parent=1 // pred_fallthru
      _
    // Predicated region
    $region22: #{classifier_head.1} parent=1 // pred_check
      _
    $region23: #{classifier_head.1} parent=1 // pred_check_branch
      %124 = sbr.rel (0) target = $region25
    $region24: #{classifier_head.1} parent=1 // pred_region
      %s126 = ssub.s32 32, 32
      %127 = vsyncadd [#allocation4], %s126
      %s129 = sshll.u32 [#allocation3], 4
      %s130 = int_to_ptr.vmem [resolvable:$true] %s129
      %132 = dma.vmem_to_hbm [thread:$0]  %s130, 32, %s3, [#allocation4]
    $region25: #{classifier_head.1} parent=1 // pred_fallthru
      _
    // Predicated region
    $region26: #{classifier_head.1} parent=1 // pred_check
      _
    $region27: #{classifier_head.1} parent=1 // pred_check_branch
      %134 = sbr.rel (0) target = $region29
    $region28: #{classifier_head.1} parent=1 // pred_region
      %135 = dma.done [#allocation4], 32
    $region29: #{classifier_head.1} parent=1 // pred_fallthru
      _
    %136 = vsyncpa [#allocation4], 1

</llo_original>
